<compile_context>
chip_gen: v6e
topology: v6e:2x2x1
jax: 0.10.0
libtpu: 0.0.40
codegen_flags: <defaults>
</compile_context>

<pallas_src>
import functools

import jax
import jax.numpy as jnp
from jax.experimental import pallas as pl
from jax.experimental.pallas import tpu as pltpu

LANE = 128      # vreg lane width  (last dim)
SUBLANE = 8     # vreg sublane width (second-to-last dim)


def _round_up(x: int, m: int) -> int:
    return ((x + m - 1) // m) * m


_ACTIVATIONS = {
    "relu": lambda y: jnp.maximum(y, 0.0),
    "tanh": jnp.tanh,
    "sigmoid": jax.nn.sigmoid,
    "gelu": jax.nn.gelu,
}


# --------------------------------------------------------------------------- #
# Parameter preparation (done ONCE, outside the forward hot path)
# --------------------------------------------------------------------------- #
def init_mlp_params(key, input_size, hiddens):
    """PyTorch-layout init mimicking nn.Linear's U(-1/sqrt(fan_in), 1/sqrt(fan_in))."""
    params = []
    prev = input_size
    for h in hiddens:
        key, kw, kb = jax.random.split(key, 3)
        bound = 1.0 / jnp.sqrt(prev)
        w = jax.random.uniform(kw, (h, prev), jnp.float32, -bound, bound)
        b = jax.random.uniform(kb, (h,), jnp.float32, -bound, bound)
        params.append((w, b))
        prev = h
    return params


def prepare_mlp_params(params):
    """One-time prep: transpose to (in, out), cast weights to bf16, and pad ONLY
    the intermediate (hidden<->hidden) feature dims to multiples of 128.

    First-layer K (= input_size) and last-layer N (= hiddens[-1]) stay exact so
    the forward pass needs no per-call x padding / output feature slicing.
    Zero padding is inert: padded weight rows/cols and bias entries are zero.
    Returns a list of (w_bf16 (in_p, out_p), b_f32 (1, out_p)).
    """
    n = len(params)
    prepared = []
    for i, (w, b) in enumerate(params):
        out_dim, in_dim = w.shape
        in_p = in_dim if i == 0 else _round_up(in_dim, LANE)
        out_p = out_dim if i == n - 1 else _round_up(out_dim, LANE)
        w_t = jnp.zeros((in_p, out_p), jnp.float32).at[:in_dim, :out_dim].set(w.T)
        b_p = jnp.zeros((1, out_p), jnp.float32).at[0, :out_dim].set(b)
        prepared.append((w_t.astype(jnp.bfloat16), b_p))
    return prepared


# --------------------------------------------------------------------------- #
# Fused MLP kernel: all layers in one body, activations stay live in registers
# --------------------------------------------------------------------------- #
def _fused_mlp_kernel(*refs, num_layers, act_flags, act_name):
    # refs = (x_ref, w0, b0, w1, b1, ..., o_ref)
    x_ref = refs[0]
    wb = refs[1:1 + 2 * num_layers]
    o_ref = refs[1 + 2 * num_layers]
    act = _ACTIVATIONS[act_name]

    y = x_ref[...].astype(jnp.float32)        # (tm, in_dim) activation, f32
    for i in range(num_layers):               # static Python loop -> unrolled
        w = wb[2 * i][...]                    # (in_p, out_p) bf16, VMEM resident
        b = wb[2 * i + 1][...]                # (1, out_p) f32
        # bf16 MXU matmul with f32 accumulation; bias/activation in f32.
        y = jnp.dot(y.astype(jnp.bfloat16), w,
                    preferred_element_type=jnp.float32) + b
        if act_flags[i]:
            y = act(y)
    o_ref[...] = y.astype(o_ref.dtype)        # only HBM writeback


def mlp_forward_pallas(x, prepared, *, out_act, activation="relu", tm=256,
                       batch_core_parallel=False):
    """x: (B, input_size) f32. prepared: output of prepare_mlp_params."""
    B, in_dim = x.shape
    num_layers = len(prepared)
    assert prepared[0][0].shape[0] == in_dim
    out_dim = prepared[-1][0].shape[1]

    act_flags = tuple(not (i == num_layers - 1 and not out_act)
                      for i in range(num_layers))

    # Batch tiling: clamp tm for tiny B; pad the batch only if it doesn't divide.
    tm = max(SUBLANE, min(tm, _round_up(B, SUBLANE)))
    b_pad = _round_up(B, tm)
    x_in = x if b_pad == B else jnp.zeros((b_pad, in_dim), x.dtype).at[:B].set(x)
    grid = (b_pad // tm,)

    flat_wb = []
    for (w, b) in prepared:
        flat_wb += [w, b]

    kernel = functools.partial(_fused_mlp_kernel, num_layers=num_layers,
                               act_flags=act_flags, act_name=activation)

    # VMEM budget: resident weights/biases (x buffer count) + double-buffered
    # x / out tiles + headroom for the in-flight f32 activations.
    def _nbytes(a):
        return a.size * a.dtype.itemsize

    weight_bytes = sum(_nbytes(a) for a in flat_wb)
    max_feat = max(max(w.shape[1] for (w, _) in prepared), in_dim)
    tile_bytes = 2 * tm * in_dim * x.dtype.itemsize + 2 * tm * out_dim * 4
    act_bytes = 4 * tm * max_feat * 4
    # TODO(synk): for very large layers (total bf16 weight bytes >~ 40 MiB, e.g.
    # hidden >= 2k on v7x's 64 MiB VMEM) stream K-blocks of each weight from
    # HBM with pltpu.emit_pipeline instead of keeping all layers VMEM-resident.

    def _build(single_buffer_weights):
        wb_mult = 1 if single_buffer_weights else 2
        needed = wb_mult * weight_bytes + tile_bytes + act_bytes
        vmem_limit = int(min(64 * 1024 * 1024,
                             max(32 * 1024 * 1024, 2 * needed + (4 << 20))))

        in_specs = [pl.BlockSpec((tm, in_dim), lambda i: (i, 0))]
        for (w, b) in prepared:
            wkw = {}
            if single_buffer_weights:
                # Constant index_map -> block never changes; a single buffer
                # halves the resident weight VMEM at zero perf cost.
                wkw["pipeline_mode"] = pl.Buffered(1)
            # Full-array blocks with a constant index_map: DMA'd into VMEM once,
            # resident across all batch tiles.
            in_specs.append(pl.BlockSpec(w.shape, lambda i: (0, 0), **wkw))
            in_specs.append(pl.BlockSpec(b.shape, lambda i: (0, 0), **wkw))

        if batch_core_parallel and grid[0] > 1:
            dim_sem = (pltpu.CORE_PARALLEL,)   # v7x: shard batch tiles over 2 TCs
        else:
            dim_sem = ("parallel",)

        return pl.pallas_call(
            kernel,
            out_shape=jax.ShapeDtypeStruct((b_pad, out_dim), jnp.float32),
            grid_spec=pltpu.PrefetchScalarGridSpec(
                num_scalar_prefetch=0,
                grid=grid,
                in_specs=in_specs,
                out_specs=pl.BlockSpec((tm, out_dim), lambda i: (i, 0)),
            ),
            compiler_params=pltpu.CompilerParams(
                dimension_semantics=dim_sem,
                vmem_limit_bytes=vmem_limit,
            ),
        )

    try:
        out = _build(single_buffer_weights=hasattr(pl, "Buffered"))(x_in, *flat_wb)
    except Exception:
        # pipeline_mode / Buffered(1) unsupported on this JAX -> default buffering.
        out = _build(single_buffer_weights=False)(x_in, *flat_wb)

    return out if b_pad == B else out[:B]


# --------------------------------------------------------------------------- #
# Pure-JAX f32 reference for correctness checking
# --------------------------------------------------------------------------- #
def mlp_reference(x, params, *, out_act, activation="relu"):
    act = _ACTIVATIONS[activation]
    n = len(params)
    for i, (w, b) in enumerate(params):
        x = x @ w.T + b
        if not (i == n - 1 and not out_act):
            x = act(x)
    return x


if __name__ == "__main__":
    key = jax.random.PRNGKey(0)
    key, kx = jax.random.split(key)

    batch = 8
    input_size = 16
    hiddens = [32, 32, 8]
    out_act = False          # reference default: no activation on the last layer
    # dropout_ratio: unused by the reference module (nn.Dropout never added).

    x = jax.random.normal(kx, (batch, input_size), jnp.float32)
    params = init_mlp_params(key, input_size, hiddens)
    prepared = prepare_mlp_params(params)      # one-time transpose / pad / bf16 cast

    out = mlp_forward_pallas(x, prepared, out_act=out_act, activation="relu")
    out = jax.block_until_ready(out)

    ref = mlp_reference(x, params, out_act=out_act, activation="relu")
    assert out.shape == (batch, hiddens[-1])
    # bf16 matmuls (f32 accumulation) vs an f32 reference -> loosened tolerance.
    err = float(jnp.max(jnp.abs(out - ref)))
    assert jnp.allclose(out, ref, atol=3e-2, rtol=3e-2), f"max abs err {err}"

    print("KERNEL_OK")
</pallas_src>

<mosaic_0001>
module attributes {stable_mosaic.version = 11 : i64} {
  func.func @_fused_mlp_kernel(%arg0: i32, %arg1: memref<8x16xf32, #tpu.memory_space<vmem>>, %arg2: memref<16x128xbf16, #tpu.memory_space<vmem>>, %arg3: memref<1x128xf32, #tpu.memory_space<vmem>>, %arg4: memref<128x128xbf16, #tpu.memory_space<vmem>>, %arg5: memref<1x128xf32, #tpu.memory_space<vmem>>, %arg6: memref<128x8xbf16, #tpu.memory_space<vmem>>, %arg7: memref<1x8xf32, #tpu.memory_space<vmem>>, %arg8: memref<8x8xf32, #tpu.memory_space<vmem>>) attributes {dimension_semantics = [#tpu.dimension_semantics<parallel>], iteration_bounds = array<i64: 1>, scalar_prefetch = 0 : i64, scratch_operands = 0 : i64, tpu.core_type = #tpu.core_type<tc>, window_params = [{transform_indices = @transform_0, window_bounds = array<i64: 8, 16>}, {pipeline_mode = #tpu.pipeline_mode<synchronous>, transform_indices = @transform_1, window_bounds = array<i64: 16, 128>}, {pipeline_mode = #tpu.pipeline_mode<synchronous>, transform_indices = @transform_2, window_bounds = array<i64: 1, 128>}, {pipeline_mode = #tpu.pipeline_mode<synchronous>, transform_indices = @transform_3, window_bounds = array<i64: 128, 128>}, {pipeline_mode = #tpu.pipeline_mode<synchronous>, transform_indices = @transform_4, window_bounds = array<i64: 1, 128>}, {pipeline_mode = #tpu.pipeline_mode<synchronous>, transform_indices = @transform_5, window_bounds = array<i64: 128, 8>}, {pipeline_mode = #tpu.pipeline_mode<synchronous>, transform_indices = @transform_6, window_bounds = array<i64: 1, 8>}, {transform_indices = @transform_7, window_bounds = array<i64: 8, 8>}]} {
    %c0 = arith.constant 0 : index
    %c0_0 = arith.constant 0 : index
    %0 = vector.load %arg1[%c0, %c0_0] : memref<8x16xf32, #tpu.memory_space<vmem>>, vector<8x16xf32>
    %c0_1 = arith.constant 0 : index
    %c0_2 = arith.constant 0 : index
    %1 = vector.load %arg2[%c0_1, %c0_2] : memref<16x128xbf16, #tpu.memory_space<vmem>>, vector<16x128xbf16>
    %c0_3 = arith.constant 0 : index
    %c0_4 = arith.constant 0 : index
    %2 = vector.load %arg3[%c0_3, %c0_4] : memref<1x128xf32, #tpu.memory_space<vmem>>, vector<1x128xf32>
    %3 = arith.truncf %0 : vector<8x16xf32> to vector<8x16xbf16>
    %cst = arith.constant dense<0.000000e+00> : vector<8x128xf32>
    %4 = tpu.matmul %3, %1, %cst {dimension_numbers = #tpu.dot_dimension_numbers<[1], [0], [0], [1], [0, 0, 1, 1], [], []>} : vector<8x16xbf16>, vector<16x128xbf16>, vector<8x128xf32> -> vector<8x128xf32>
    %5 = vector.broadcast %2 : vector<1x128xf32> to vector<8x128xf32>
    %6 = arith.addf %4, %5 : vector<8x128xf32>
    %cst_5 = arith.constant 0.000000e+00 : f32
    %7 = vector.broadcast %cst_5 : f32 to vector<8x128xf32>
    %8 = arith.maximumf %6, %7 : vector<8x128xf32>
    %c0_6 = arith.constant 0 : index
    %c0_7 = arith.constant 0 : index
    %9 = vector.load %arg4[%c0_6, %c0_7] : memref<128x128xbf16, #tpu.memory_space<vmem>>, vector<128x128xbf16>
    %c0_8 = arith.constant 0 : index
    %c0_9 = arith.constant 0 : index
    %10 = vector.load %arg5[%c0_8, %c0_9] : memref<1x128xf32, #tpu.memory_space<vmem>>, vector<1x128xf32>
    %11 = arith.truncf %8 : vector<8x128xf32> to vector<8x128xbf16>
    %cst_10 = arith.constant dense<0.000000e+00> : vector<8x128xf32>
    %12 = tpu.matmul %11, %9, %cst_10 {dimension_numbers = #tpu.dot_dimension_numbers<[1], [0], [0], [1], [0, 0, 1, 1], [], []>} : vector<8x128xbf16>, vector<128x128xbf16>, vector<8x128xf32> -> vector<8x128xf32>
    %13 = vector.broadcast %10 : vector<1x128xf32> to vector<8x128xf32>
    %14 = arith.addf %12, %13 : vector<8x128xf32>
    %cst_11 = arith.constant 0.000000e+00 : f32
    %15 = vector.broadcast %cst_11 : f32 to vector<8x128xf32>
    %16 = arith.maximumf %14, %15 : vector<8x128xf32>
    %c0_12 = arith.constant 0 : index
    %c0_13 = arith.constant 0 : index
    %17 = vector.load %arg6[%c0_12, %c0_13] : memref<128x8xbf16, #tpu.memory_space<vmem>>, vector<128x8xbf16>
    %c0_14 = arith.constant 0 : index
    %c0_15 = arith.constant 0 : index
    %18 = vector.load %arg7[%c0_14, %c0_15] : memref<1x8xf32, #tpu.memory_space<vmem>>, vector<1x8xf32>
    %19 = arith.truncf %16 : vector<8x128xf32> to vector<8x128xbf16>
    %cst_16 = arith.constant dense<0.000000e+00> : vector<8x8xf32>
    %20 = tpu.matmul %19, %17, %cst_16 {dimension_numbers = #tpu.dot_dimension_numbers<[1], [0], [0], [1], [0, 0, 1, 1], [], []>} : vector<8x128xbf16>, vector<128x8xbf16>, vector<8x8xf32> -> vector<8x8xf32>
    %21 = vector.broadcast %18 : vector<1x8xf32> to vector<8x8xf32>
    %22 = arith.addf %20, %21 : vector<8x8xf32>
    %c0_17 = arith.constant 0 : index
    %c0_18 = arith.constant 0 : index
    %23 = vector.load %arg8[%c0_17, %c0_18] : memref<8x8xf32, #tpu.memory_space<vmem>>, vector<8x8xf32>
    tpu.vector_store %arg8[%c0_17, %c0_18], %22 {strides = array<i32>} : memref<8x8xf32, #tpu.memory_space<vmem>>, vector<8x8xf32>,
    return
  }
  func.func @transform_0(%arg0: i32) -> (i32, i32) {
    %c0_i32 = arith.constant 0 : i32
    %c0_i32_0 = arith.constant 0 : i32
    return %arg0, %c0_i32 : i32, i32
  }
  func.func @transform_1(%arg0: i32) -> (i32, i32) {
    %c0_i32 = arith.constant 0 : i32
    %c0_i32_0 = arith.constant 0 : i32
    %c0_i32_1 = arith.constant 0 : i32
    return %c0_i32, %c0_i32_0 : i32, i32
  }
  func.func @transform_2(%arg0: i32) -> (i32, i32) {
    %c0_i32 = arith.constant 0 : i32
    %c0_i32_0 = arith.constant 0 : i32
    %c0_i32_1 = arith.constant 0 : i32
    return %c0_i32, %c0_i32_0 : i32, i32
  }
  func.func @transform_3(%arg0: i32) -> (i32, i32) {
    %c0_i32 = arith.constant 0 : i32
    %c0_i32_0 = arith.constant 0 : i32
    %c0_i32_1 = arith.constant 0 : i32
    return %c0_i32, %c0_i32_0 : i32, i32
  }
  func.func @transform_4(%arg0: i32) -> (i32, i32) {
    %c0_i32 = arith.constant 0 : i32
    %c0_i32_0 = arith.constant 0 : i32
    %c0_i32_1 = arith.constant 0 : i32
    return %c0_i32, %c0_i32_0 : i32, i32
  }
  func.func @transform_5(%arg0: i32) -> (i32, i32) {
    %c0_i32 = arith.constant 0 : i32
    %c0_i32_0 = arith.constant 0 : i32
    %c0_i32_1 = arith.constant 0 : i32
    return %c0_i32, %c0_i32_0 : i32, i32
  }
  func.func @transform_6(%arg0: i32) -> (i32, i32) {
    %c0_i32 = arith.constant 0 : i32
    %c0_i32_0 = arith.constant 0 : i32
    %c0_i32_1 = arith.constant 0 : i32
    return %c0_i32, %c0_i32_0 : i32, i32
  }
  func.func @transform_7(%arg0: i32) -> (i32, i32) {
    %c0_i32 = arith.constant 0 : i32
    %c0_i32_0 = arith.constant 0 : i32
    return %arg0, %c0_i32 : i32, i32
  }
}

module attributes {stable_mosaic.version = 11 : i64} {
  func.func @_fused_mlp_kernel(%arg0: i32, %arg1: memref<8x16xf32, #tpu.memory_space<vmem>>, %arg2: memref<16x128xbf16, #tpu.memory_space<vmem>>, %arg3: memref<1x128xf32, #tpu.memory_space<vmem>>, %arg4: memref<128x128xbf16, #tpu.memory_space<vmem>>, %arg5: memref<1x128xf32, #tpu.memory_space<vmem>>, %arg6: memref<128x8xbf16, #tpu.memory_space<vmem>>, %arg7: memref<1x8xf32, #tpu.memory_space<vmem>>, %arg8: memref<8x8xf32, #tpu.memory_space<vmem>>) attributes {dimension_semantics = [#tpu.dimension_semantics<parallel>], iteration_bounds = array<i64: 1>, scalar_prefetch = 0 : i64, scratch_operands = 0 : i64, tpu.core_type = #tpu.core_type<tc>, window_params = [{transform_indices = @transform_0, window_bounds = array<i64: 8, 16>}, {pipeline_mode = #tpu.pipeline_mode<synchronous>, transform_indices = @transform_1, window_bounds = array<i64: 16, 128>}, {pipeline_mode = #tpu.pipeline_mode<synchronous>, transform_indices = @transform_2, window_bounds = array<i64: 1, 128>}, {pipeline_mode = #tpu.pipeline_mode<synchronous>, transform_indices = @transform_3, window_bounds = array<i64: 128, 128>}, {pipeline_mode = #tpu.pipeline_mode<synchronous>, transform_indices = @transform_4, window_bounds = array<i64: 1, 128>}, {pipeline_mode = #tpu.pipeline_mode<synchronous>, transform_indices = @transform_5, window_bounds = array<i64: 128, 8>}, {pipeline_mode = #tpu.pipeline_mode<synchronous>, transform_indices = @transform_6, window_bounds = array<i64: 1, 8>}, {transform_indices = @transform_7, window_bounds = array<i64: 8, 8>}]} {
    %c0 = arith.constant 0 : index
    %c0_0 = arith.constant 0 : index
    %0 = vector.load %arg1[%c0, %c0_0] : memref<8x16xf32, #tpu.memory_space<vmem>>, vector<8x16xf32>
    %c0_1 = arith.constant 0 : index
    %c0_2 = arith.constant 0 : index
    %1 = vector.load %arg2[%c0_1, %c0_2] : memref<16x128xbf16, #tpu.memory_space<vmem>>, vector<16x128xbf16>
    %c0_3 = arith.constant 0 : index
    %c0_4 = arith.constant 0 : index
    %2 = vector.load %arg3[%c0_3, %c0_4] : memref<1x128xf32, #tpu.memory_space<vmem>>, vector<1x128xf32>
    %3 = arith.truncf %0 : vector<8x16xf32> to vector<8x16xbf16>
    %cst = arith.constant dense<0.000000e+00> : vector<8x128xf32>
    %4 = tpu.matmul %3, %1, %cst {dimension_numbers = #tpu.dot_dimension_numbers<[1], [0], [0], [1], [0, 0, 1, 1], [], []>} : vector<8x16xbf16>, vector<16x128xbf16>, vector<8x128xf32> -> vector<8x128xf32>
    %5 = vector.broadcast %2 : vector<1x128xf32> to vector<8x128xf32>
    %6 = arith.addf %4, %5 : vector<8x128xf32>
    %cst_5 = arith.constant 0.000000e+00 : f32
    %7 = vector.broadcast %cst_5 : f32 to vector<8x128xf32>
    %8 = arith.maximumf %6, %7 : vector<8x128xf32>
    %c0_6 = arith.constant 0 : index
    %c0_7 = arith.constant 0 : index
    %9 = vector.load %arg4[%c0_6, %c0_7] : memref<128x128xbf16, #tpu.memory_space<vmem>>, vector<128x128xbf16>
    %c0_8 = arith.constant 0 : index
    %c0_9 = arith.constant 0 : index
    %10 = vector.load %arg5[%c0_8, %c0_9] : memref<1x128xf32, #tpu.memory_space<vmem>>, vector<1x128xf32>
    %11 = arith.truncf %8 : vector<8x128xf32> to vector<8x128xbf16>
    %cst_10 = arith.constant dense<0.000000e+00> : vector<8x128xf32>
    %12 = tpu.matmul %11, %9, %cst_10 {dimension_numbers = #tpu.dot_dimension_numbers<[1], [0], [0], [1], [0, 0, 1, 1], [], []>} : vector<8x128xbf16>, vector<128x128xbf16>, vector<8x128xf32> -> vector<8x128xf32>
    %13 = vector.broadcast %10 : vector<1x128xf32> to vector<8x128xf32>
    %14 = arith.addf %12, %13 : vector<8x128xf32>
    %cst_11 = arith.constant 0.000000e+00 : f32
    %15 = vector.broadcast %cst_11 : f32 to vector<8x128xf32>
    %16 = arith.maximumf %14, %15 : vector<8x128xf32>
    %c0_12 = arith.constant 0 : index
    %c0_13 = arith.constant 0 : index
    %17 = vector.load %arg6[%c0_12, %c0_13] : memref<128x8xbf16, #tpu.memory_space<vmem>>, vector<128x8xbf16>
    %c0_14 = arith.constant 0 : index
    %c0_15 = arith.constant 0 : index
    %18 = vector.load %arg7[%c0_14, %c0_15] : memref<1x8xf32, #tpu.memory_space<vmem>>, vector<1x8xf32>
    %19 = arith.truncf %16 : vector<8x128xf32> to vector<8x128xbf16>
    %cst_16 = arith.constant dense<0.000000e+00> : vector<8x8xf32>
    %20 = tpu.matmul %19, %17, %cst_16 {dimension_numbers = #tpu.dot_dimension_numbers<[1], [0], [0], [1], [0, 0, 1, 1], [], []>} : vector<8x128xbf16>, vector<128x8xbf16>, vector<8x8xf32> -> vector<8x8xf32>
    %21 = vector.broadcast %18 : vector<1x8xf32> to vector<8x8xf32>
    %22 = arith.addf %20, %21 : vector<8x8xf32>
    %c0_17 = arith.constant 0 : index
    %c0_18 = arith.constant 0 : index
    %23 = vector.load %arg8[%c0_17, %c0_18] : memref<8x8xf32, #tpu.memory_space<vmem>>, vector<8x8xf32>
    tpu.vector_store %arg8[%c0_17, %c0_18], %22 {strides = array<i32>} : memref<8x8xf32, #tpu.memory_space<vmem>>, vector<8x8xf32>,
    return
  }
  func.func @transform_0(%arg0: i32) -> (i32, i32) {
    %c0_i32 = arith.constant 0 : i32
    %c0_i32_0 = arith.constant 0 : i32
    return %arg0, %c0_i32 : i32, i32
  }
  func.func @transform_1(%arg0: i32) -> (i32, i32) {
    %c0_i32 = arith.constant 0 : i32
    %c0_i32_0 = arith.constant 0 : i32
    %c0_i32_1 = arith.constant 0 : i32
    return %c0_i32, %c0_i32_0 : i32, i32
  }
  func.func @transform_2(%arg0: i32) -> (i32, i32) {
    %c0_i32 = arith.constant 0 : i32
    %c0_i32_0 = arith.constant 0 : i32
    %c0_i32_1 = arith.constant 0 : i32
    return %c0_i32, %c0_i32_0 : i32, i32
  }
  func.func @transform_3(%arg0: i32) -> (i32, i32) {
    %c0_i32 = arith.constant 0 : i32
    %c0_i32_0 = arith.constant 0 : i32
    %c0_i32_1 = arith.constant 0 : i32
    return %c0_i32, %c0_i32_0 : i32, i32
  }
  func.func @transform_4(%arg0: i32) -> (i32, i32) {
    %c0_i32 = arith.constant 0 : i32
    %c0_i32_0 = arith.constant 0 : i32
    %c0_i32_1 = arith.constant 0 : i32
    return %c0_i32, %c0_i32_0 : i32, i32
  }
  func.func @transform_5(%arg0: i32) -> (i32, i32) {
    %c0_i32 = arith.constant 0 : i32
    %c0_i32_0 = arith.constant 0 : i32
    %c0_i32_1 = arith.constant 0 : i32
    return %c0_i32, %c0_i32_0 : i32, i32
  }
  func.func @transform_6(%arg0: i32) -> (i32, i32) {
    %c0_i32 = arith.constant 0 : i32
    %c0_i32_0 = arith.constant 0 : i32
    %c0_i32_1 = arith.constant 0 : i32
    return %c0_i32, %c0_i32_0 : i32, i32
  }
  func.func @transform_7(%arg0: i32) -> (i32, i32) {
    %c0_i32 = arith.constant 0 : i32
    %c0_i32_0 = arith.constant 0 : i32
    return %arg0, %c0_i32 : i32, i32
  }
}

</mosaic_0001>

<llo_original>
// kernel: tpu_custom_call.1
$region0: #{tpu_custom_call.1}
  #allocation0 [shape = 'u32[]', space=smem, size = 0x4, offset = 0x4, fixed_abs, tag = 'smem constant byte address 0x4 - core index']
  #allocation1 [shape = 'u32[144,128]{1,0:T(1,128)}', space=vmem, size = 0x12000, scoped, tag = 'internal scratch']
  %s0 = inlined_call_operand.vmem [shape: f32[8,16], index: 0, kind: input, shape index: {}]
  %s1 = inlined_call_operand.hbm [shape: bf16[16,128], index: 1, kind: input, shape index: {}]
  %s2 = inlined_call_operand.vmem [shape: f32[1,128], index: 2, kind: input, shape index: {}]
  %s3 = inlined_call_operand.vmem [shape: bf16[128,128], index: 3, kind: input, shape index: {}]
  %s4 = inlined_call_operand.hbm [shape: f32[1,128], index: 4, kind: input, shape index: {}]
  %s5 = inlined_call_operand.vmem [shape: bf16[128,8], index: 5, kind: input, shape index: {}]
  %s6 = inlined_call_operand.vmem [shape: f32[1,8], index: 6, kind: input, shape index: {}]
  %s7 = inlined_call_operand.hbm [shape: f32[8,8], index: 7, kind: output, shape index: {}]
  %s8 = sld [smem:[#allocation0]]
  $region46: #{tpu_custom_call.1} parent=0
    _
  %s10 = ssub.s32 1, %s8
  %s11 = scalar_select 0, %s10, %s8
  $region1: #{tpu_custom_call.1} parent=0
    #allocation2 [shape = 'u8[4096]{0}', space=vmem, size = 0x1000, scoped, tag = 'input window, operand 1, single buffered']
    #allocation3 [shape = 's32[1]{0}', space=sflag, size = 0x4, scoped, tag = 'scoped memory for tpu_custom_call.1']
    #allocation4 [shape = 's32[1]{0}', space=sflag, size = 0x4, scoped, tag = 'scoped memory for tpu_custom_call.1']
    #allocation5 [shape = 'u8[512]{0}', space=vmem, size = 0x400, scoped, tag = 'input window, operand 4, single buffered']
    #allocation6 [shape = 's32[1]{0}', space=sflag, size = 0x4, scoped, tag = 'scoped memory for tpu_custom_call.1']
    #allocation7 [shape = 'u8[4096]{0}', space=vmem, size = 0x1000, scoped, tag = 'output window, operand 0, single buffered']
    %12 = vsyncpa [#allocation3], 0
    %13 = vsyncpa [#allocation6], 0
    %14 = vsyncpa [#allocation4], 0
    // Predicated region
    $region2: #{tpu_custom_call.1} parent=1 // pred_check
      _
    $region3: #{tpu_custom_call.1} parent=1 // pred_check_branch
      %16 = sbr.rel (0) target = $region5
    $region4: #{tpu_custom_call.1} parent=1 // pred_region
      _
    $region5: #{tpu_custom_call.1} parent=1 // pred_fallthru
      _
    // Predicated region
    $region6: #{tpu_custom_call.1} parent=1 // pred_check
      _
    $region7: #{tpu_custom_call.1} parent=1 // pred_check_branch
      %18 = sbr.rel (0) target = $region9
    $region8: #{tpu_custom_call.1} parent=1 // pred_region
      %s20 = ssub.s32 128, 128
      %21 = vsyncadd [#allocation3], %s20
      %s22 = sshll.u32 [#allocation2], 4
      %s23 = int_to_ptr.vmem [resolvable:$true] %s22
      %28 = dma.hbm_to_vmem [thread:$0]  %s1, 128, %s23, [#allocation3], 64, 64, 4
    $region9: #{tpu_custom_call.1} parent=1 // pred_fallthru
      _
    // Predicated region
    $region10: #{tpu_custom_call.1} parent=1 // pred_check
      _
    $region11: #{tpu_custom_call.1} parent=1 // pred_check_branch
      %30 = sbr.rel (0) target = $region13
    $region12: #{tpu_custom_call.1} parent=1 // pred_region
      _
    $region13: #{tpu_custom_call.1} parent=1 // pred_fallthru
      _
    // Predicated region
    $region14: #{tpu_custom_call.1} parent=1 // pred_check
      _
    $region15: #{tpu_custom_call.1} parent=1 // pred_check_branch
      %32 = sbr.rel (0) target = $region17
    $region16: #{tpu_custom_call.1} parent=1 // pred_region
      _
    $region17: #{tpu_custom_call.1} parent=1 // pred_fallthru
      _
    // Predicated region
    $region18: #{tpu_custom_call.1} parent=1 // pred_check
      _
    $region19: #{tpu_custom_call.1} parent=1 // pred_check_branch
      %34 = sbr.rel (0) target = $region21
    $region20: #{tpu_custom_call.1} parent=1 // pred_region
      %s36 = ssub.s32 16, 16
      %37 = vsyncadd [#allocation6], %s36
      %s39 = sshll.u32 [#allocation5], 4
      %s40 = int_to_ptr.vmem [resolvable:$true] %s39
      %42 = dma.hbm_to_vmem [thread:$0]  %s4, 16, %s40, [#allocation6]
    $region21: #{tpu_custom_call.1} parent=1 // pred_fallthru
      _
    // Predicated region
    $region22: #{tpu_custom_call.1} parent=1 // pred_check
      _
    $region23: #{tpu_custom_call.1} parent=1 // pred_check_branch
      %44 = sbr.rel (0) target = $region25
    $region24: #{tpu_custom_call.1} parent=1 // pred_region
      _
    $region25: #{tpu_custom_call.1} parent=1 // pred_fallthru
      _
    // Predicated region
    $region26: #{tpu_custom_call.1} parent=1 // pred_check
      _
    $region27: #{tpu_custom_call.1} parent=1 // pred_check_branch
      %46 = sbr.rel (0) target = $region29
    $region28: #{tpu_custom_call.1} parent=1 // pred_region
      _
    $region29: #{tpu_custom_call.1} parent=1 // pred_fallthru
      _
    // Predicated region
    $region30: #{tpu_custom_call.1} parent=1 // pred_check
      _
    $region31: #{tpu_custom_call.1} parent=1 // pred_check_branch
      %48 = sbr.rel (0) target = $region33
    $region32: #{tpu_custom_call.1} parent=1 // pred_region
      %49 = dma.done [#allocation3], 128
    $region33: #{tpu_custom_call.1} parent=1 // pred_fallthru
      _
    // Predicated region
    $region34: #{tpu_custom_call.1} parent=1 // pred_check
      _
    $region35: #{tpu_custom_call.1} parent=1 // pred_check_branch
      %51 = sbr.rel (0) target = $region37
    $region36: #{tpu_custom_call.1} parent=1 // pred_region
      %52 = dma.done [#allocation6], 16
    $region37: #{tpu_custom_call.1} parent=1 // pred_fallthru
      _
    %v54 = vld [vmem:[%s0] sm:$0xff]
    %v55 = vld [vmem:[#allocation2] sm:$0xf]
    %v56 = vld [vmem:[#allocation2 + $0x4] sm:$0xf]
    %v57 = vld [vmem:[%s2] sm:$0x1]
    %v58 = vpack.c.bf16 %v54, %v54
    %v60 = vlaneseq
    %v61 = vshrl.u32 %v60, 7
    %v62 = vsub.s32 0, %v61
    %v63 = vrot.slane %v57, %v62
    %v67 = vunpack.c.l.b16 %v55
    %v68 = vunpack.c.l.b16 %v56
    %v69 = vpack.c.b16 %v68, %v67
    %vm71 = vcmask 130048
    %v73 = vsel %vm71, %v58, 0
    %75 = vmatprep.subr.bf16.mxu0 0
    %76 = vmatpush1.bf16.msra.mxu0 0
    %77 = vmatprep.subr.bf16.mxu0 0
    %78 = vmatpush1.bf16.msra.mxu0 0
    %79 = vmatprep.subr.bf16.mxu0 0
    %80 = vmatpush1.bf16.msra.mxu0 0
    %81 = vmatprep.subr.bf16.mxu0 0
    %82 = vmatpush1.bf16.msra.mxu0 0
    %83 = vmatprep.subr.bf16.mxu0 0
    %84 = vmatpush1.bf16.msra.mxu0 0
    %85 = vmatprep.subr.bf16.mxu0 0
    %86 = vmatpush1.bf16.msra.mxu0 0
    %87 = vmatprep.subr.bf16.mxu0 0
    %88 = vmatpush1.bf16.msra.mxu0 0
    %89 = vmatprep.subr.bf16.mxu0 0
    %90 = vmatpush1.bf16.msra.mxu0 %v69
    %91 = vmatprep.subr.bf16.mxu0 0
    %92 = vmatpush2.bf16.msra.mxu0 0
    %93 = vmatprep.subr.bf16.mxu0 0
    %94 = vmatpush2.bf16.msra.mxu0 0
    %95 = vmatprep.subr.bf16.mxu0 0
    %96 = vmatpush2.bf16.msra.mxu0 0
    %97 = vmatprep.subr.bf16.mxu0 0
    %98 = vmatpush2.bf16.msra.mxu0 0
    %99 = vmatprep.subr.bf16.mxu0 0
    %100 = vmatpush2.bf16.msra.mxu0 0
    %101 = vmatprep.subr.bf16.mxu0 0
    %102 = vmatpush2.bf16.msra.mxu0 0
    %103 = vmatprep.subr.bf16.mxu0 0
    %104 = vmatpush2.bf16.msra.mxu0 0
    %105 = vmatprep.subr.bf16.mxu0 0
    %106 = vmatpush2.bf16.msra.mxu0 0
    %107 = vmatprep.mubr.bf16.mxu0 0
    %108 = vmatmul.mubr.bf16.gmra.mxu0 %v73
    %v109 = vpop.f32.mrf.mxu0
    %v110 = vadd.f32 %v63, %v109
    %v111 = vpop.f32.mrf.mxu0
    %v112 = vpop.f32.mrf.mxu0
    %v113 = vpop.f32.mrf.mxu0
    %114 = vdwg.mxu0
    %v115 = vmax.f32 %v110, 0.0
    %v116 = vld [vmem:[%s3] sm:$0xf]
    %v117 = vld [vmem:[%s3 + $0x4] sm:$0xf]
    %v118 = vld [vmem:[%s3 + $0x8] sm:$0xf]
    %v119 = vld [vmem:[%s3 + $0xc] sm:$0xf]
    %v120 = vld [vmem:[%s3 + $0x10] sm:$0xf]
    %v121 = vld [vmem:[%s3 + $0x14] sm:$0xf]
    %v122 = vld [vmem:[%s3 + $0x18] sm:$0xf]
    %v123 = vld [vmem:[%s3 + $0x1c] sm:$0xf]
    %v124 = vld [vmem:[%s3 + $0x20] sm:$0xf]
    %v125 = vld [vmem:[%s3 + $0x24] sm:$0xf]
    %v126 = vld [vmem:[%s3 + $0x28] sm:$0xf]
    %v127 = vld [vmem:[%s3 + $0x2c] sm:$0xf]
    %v128 = vld [vmem:[%s3 + $0x30] sm:$0xf]
    %v129 = vld [vmem:[%s3 + $0x34] sm:$0xf]
    %v130 = vld [vmem:[%s3 + $0x38] sm:$0xf]
    %v131 = vld [vmem:[%s3 + $0x3c] sm:$0xf]
    %v132 = vld [vmem:[#allocation5] sm:$0x1]
    %v133 = vpack.c.bf16 %v115, %v115
    %v135 = vlaneseq
    %v136 = vshrl.u32 %v135, 7
    %v137 = vsub.s32 0, %v136
    %v138 = vrot.slane %v132, %v137
    %v156 = vunpack.c.l.b16 %v116
    %v157 = vunpack.c.l.b16 %v117
    %v158 = vunpack.c.l.b16 %v118
    %v159 = vunpack.c.l.b16 %v119
    %v160 = vunpack.c.l.b16 %v120
    %v161 = vunpack.c.l.b16 %v121
    %v162 = vunpack.c.l.b16 %v122
    %v163 = vunpack.c.l.b16 %v123
    %v164 = vunpack.c.l.b16 %v124
    %v165 = vunpack.c.l.b16 %v125
    %v166 = vunpack.c.l.b16 %v126
    %v167 = vunpack.c.l.b16 %v127
    %v168 = vunpack.c.l.b16 %v128
    %v169 = vunpack.c.l.b16 %v129
    %v170 = vunpack.c.l.b16 %v130
    %v171 = vunpack.c.l.b16 %v131
    %v172 = vpack.c.b16 %v157, %v156
    %v173 = vpack.c.b16 %v159, %v158
    %v174 = vpack.c.b16 %v161, %v160
    %v175 = vpack.c.b16 %v163, %v162
    %v176 = vpack.c.b16 %v165, %v164
    %v177 = vpack.c.b16 %v167, %v166
    %v178 = vpack.c.b16 %v169, %v168
    %v179 = vpack.c.b16 %v171, %v170
    %188 = vmatprep.subr.bf16.mxu0 0
    %189 = vmatpush1.bf16.msra.mxu0 %v179
    %190 = vmatprep.subr.bf16.mxu0 0
    %191 = vmatpush1.bf16.msra.mxu0 %v178
    %192 = vmatprep.subr.bf16.mxu0 0
    %193 = vmatpush1.bf16.msra.mxu0 %v177
    %194 = vmatprep.subr.bf16.mxu0 0
    %195 = vmatpush1.bf16.msra.mxu0 %v176
    %196 = vmatprep.subr.bf16.mxu0 0
    %197 = vmatpush1.bf16.msra.mxu0 %v175
    %198 = vmatprep.subr.bf16.mxu0 0
    %199 = vmatpush1.bf16.msra.mxu0 %v174
    %200 = vmatprep.subr.bf16.mxu0 0
    %201 = vmatpush1.bf16.msra.mxu0 %v173
    %202 = vmatprep.subr.bf16.mxu0 0
    %203 = vmatpush1.bf16.msra.mxu0 %v172
    %204 = vmatprep.subr.bf16.mxu0 0
    %205 = vmatpush2.bf16.msra.mxu0 0
    %206 = vmatprep.subr.bf16.mxu0 0
    %207 = vmatpush2.bf16.msra.mxu0 0
    %208 = vmatprep.subr.bf16.mxu0 0
    %209 = vmatpush2.bf16.msra.mxu0 0
    %210 = vmatprep.subr.bf16.mxu0 0
    %211 = vmatpush2.bf16.msra.mxu0 0
    %212 = vmatprep.subr.bf16.mxu0 0
    %213 = vmatpush2.bf16.msra.mxu0 0
    %214 = vmatprep.subr.bf16.mxu0 0
    %215 = vmatpush2.bf16.msra.mxu0 0
    %216 = vmatprep.subr.bf16.mxu0 0
    %217 = vmatpush2.bf16.msra.mxu0 0
    %218 = vmatprep.subr.bf16.mxu0 0
    %219 = vmatpush2.bf16.msra.mxu0 0
    %220 = vmatprep.mubr.bf16.mxu0 0
    %221 = vmatmul.mubr.bf16.gmra.mxu0 %v133
    %v222 = vpop.f32.mrf.mxu0
    %v223 = vadd.f32 %v138, %v222
    %v224 = vpop.f32.mrf.mxu0
    %v225 = vpop.f32.mrf.mxu0
    %v226 = vpop.f32.mrf.mxu0
    %227 = vdwg.mxu0
    %v228 = vmax.f32 %v223, 0.0
    %v229 = vld [vmem:[%s5] sm:$0xf]
    %v230 = vld [vmem:[%s5 + $0x4] sm:$0xf]
    %v231 = vld [vmem:[%s5 + $0x8] sm:$0xf]
    %v232 = vld [vmem:[%s5 + $0xc] sm:$0xf]
    %v233 = vld [vmem:[%s5 + $0x10] sm:$0xf]
    %v234 = vld [vmem:[%s5 + $0x14] sm:$0xf]
    %v235 = vld [vmem:[%s5 + $0x18] sm:$0xf]
    %v236 = vld [vmem:[%s5 + $0x1c] sm:$0xf]
    %v237 = vld [vmem:[%s5 + $0x20] sm:$0xf]
    %v238 = vld [vmem:[%s5 + $0x24] sm:$0xf]
    %v239 = vld [vmem:[%s5 + $0x28] sm:$0xf]
    %v240 = vld [vmem:[%s5 + $0x2c] sm:$0xf]
    %v241 = vld [vmem:[%s5 + $0x30] sm:$0xf]
    %v242 = vld [vmem:[%s5 + $0x34] sm:$0xf]
    %v243 = vld [vmem:[%s5 + $0x38] sm:$0xf]
    %v244 = vld [vmem:[%s5 + $0x3c] sm:$0xf]
    %v245 = vld [vmem:[%s6] sm:$0x1]
    %v246 = vpack.c.bf16 %v228, %v228
    %v248 = vlaneseq
    %v249 = vshrl.u32 %v248, 7
    %v250 = vsub.s32 0, %v249
    %v251 = vrot.slane %v245, %v250
    %v269 = vunpack.c.l.b16 %v229
    %v270 = vunpack.c.l.b16 %v230
    %v271 = vunpack.c.l.b16 %v231
    %v272 = vunpack.c.l.b16 %v232
    %v273 = vunpack.c.l.b16 %v233
    %v274 = vunpack.c.l.b16 %v234
    %v275 = vunpack.c.l.b16 %v235
    %v276 = vunpack.c.l.b16 %v236
    %v277 = vunpack.c.l.b16 %v237
    %v278 = vunpack.c.l.b16 %v238
    %v279 = vunpack.c.l.b16 %v239
    %v280 = vunpack.c.l.b16 %v240
    %v281 = vunpack.c.l.b16 %v241
    %v282 = vunpack.c.l.b16 %v242
    %v283 = vunpack.c.l.b16 %v243
    %v284 = vunpack.c.l.b16 %v244
    %v285 = vpack.c.b16 %v270, %v269
    %v286 = vpack.c.b16 %v272, %v271
    %v287 = vpack.c.b16 %v274, %v273
    %v288 = vpack.c.b16 %v276, %v275
    %v289 = vpack.c.b16 %v278, %v277
    %v290 = vpack.c.b16 %v280, %v279
    %v291 = vpack.c.b16 %v282, %v281
    %v292 = vpack.c.b16 %v284, %v283
    %301 = vmatprep.subr.bf16.mxu0 0
    %302 = vmatpush1.bf16.msra.mxu0 %v292
    %303 = vmatprep.subr.bf16.mxu0 0
    %304 = vmatpush1.bf16.msra.mxu0 %v291
    %305 = vmatprep.subr.bf16.mxu0 0
    %306 = vmatpush1.bf16.msra.mxu0 %v290
    %307 = vmatprep.subr.bf16.mxu0 0
    %308 = vmatpush1.bf16.msra.mxu0 %v289
    %309 = vmatprep.subr.bf16.mxu0 0
    %310 = vmatpush1.bf16.msra.mxu0 %v288
    %311 = vmatprep.subr.bf16.mxu0 0
    %312 = vmatpush1.bf16.msra.mxu0 %v287
    %313 = vmatprep.subr.bf16.mxu0 0
    %314 = vmatpush1.bf16.msra.mxu0 %v286
    %315 = vmatprep.subr.bf16.mxu0 0
    %316 = vmatpush1.bf16.msra.mxu0 %v285
    %317 = vmatprep.subr.bf16.mxu0 0
    %318 = vmatpush2.bf16.msra.mxu0 0
    %319 = vmatprep.subr.bf16.mxu0 0
    %320 = vmatpush2.bf16.msra.mxu0 0
    %321 = vmatprep.subr.bf16.mxu0 0
    %322 = vmatpush2.bf16.msra.mxu0 0
    %323 = vmatprep.subr.bf16.mxu0 0
    %324 = vmatpush2.bf16.msra.mxu0 0
    %325 = vmatprep.subr.bf16.mxu0 0
    %326 = vmatpush2.bf16.msra.mxu0 0
    %327 = vmatprep.subr.bf16.mxu0 0
    %328 = vmatpush2.bf16.msra.mxu0 0
    %329 = vmatprep.subr.bf16.mxu0 0
    %330 = vmatpush2.bf16.msra.mxu0 0
    %331 = vmatprep.subr.bf16.mxu0 0
    %332 = vmatpush2.bf16.msra.mxu0 0
    %333 = vmatprep.mubr.bf16.mxu0 0
    %334 = vmatmul.mubr.bf16.gmra.mxu0 %v246
    %v335 = vpop.f32.mrf.mxu0
    %v336 = vadd.f32 %v251, %v335
    %v337 = vpop.f32.mrf.mxu0
    %v338 = vpop.f32.mrf.mxu0
    %v339 = vpop.f32.mrf.mxu0
    %340 = vdwg.mxu0
    %vm341 = vcmask 64512
    %342 = vst.msk [vmem:[#allocation7] sm:$0xff] %vm341, %v336
    // Predicated region
    $region38: #{tpu_custom_call.1} parent=1 // pred_check
      _
    $region39: #{tpu_custom_call.1} parent=1 // pred_check_branch
      %344 = sbr.rel (0) target = $region41
    $region40: #{tpu_custom_call.1} parent=1 // pred_region
      %s346 = ssub.s32 128, 128
      %347 = vsyncadd [#allocation4], %s346
      %s349 = sshll.u32 [#allocation7], 4
      %s350 = int_to_ptr.vmem [resolvable:$true] %s349
      %352 = dma.vmem_to_hbm [thread:$0]  %s350, 128, %s7, [#allocation4]
    $region41: #{tpu_custom_call.1} parent=1 // pred_fallthru
      _
    // Predicated region
    $region42: #{tpu_custom_call.1} parent=1 // pred_check
      _
    $region43: #{tpu_custom_call.1} parent=1 // pred_check_branch
      %354 = sbr.rel (0) target = $region45
    $region44: #{tpu_custom_call.1} parent=1 // pred_region
      %355 = dma.done [#allocation4], 128
    $region45: #{tpu_custom_call.1} parent=1 // pred_fallthru
      _
    %356 = vsyncpa [#allocation3], 1
    %357 = vsyncpa [#allocation6], 1
    %358 = vsyncpa [#allocation4], 1

// kernel: tpu_custom_call.1
$region0: #{tpu_custom_call.1}
  #allocation0 [shape = 'u32[]', space=smem, size = 0x4, offset = 0x4, fixed_abs, tag = 'smem constant byte address 0x4 - core index']
  #allocation1 [shape = 'u32[144,128]{1,0:T(1,128)}', space=vmem, size = 0x12000, scoped, tag = 'internal scratch']
  %s0 = inlined_call_operand.vmem [shape: f32[8,16], index: 0, kind: input, shape index: {}]
  %s1 = inlined_call_operand.hbm [shape: bf16[16,128], index: 1, kind: input, shape index: {}]
  %s2 = inlined_call_operand.vmem [shape: f32[1,128], index: 2, kind: input, shape index: {}]
  %s3 = inlined_call_operand.vmem [shape: bf16[128,128], index: 3, kind: input, shape index: {}]
  %s4 = inlined_call_operand.hbm [shape: f32[1,128], index: 4, kind: input, shape index: {}]
  %s5 = inlined_call_operand.vmem [shape: bf16[128,8], index: 5, kind: input, shape index: {}]
  %s6 = inlined_call_operand.vmem [shape: f32[1,8], index: 6, kind: input, shape index: {}]
  %s7 = inlined_call_operand.hbm [shape: f32[8,8], index: 7, kind: output, shape index: {}]
  %s8 = sld [smem:[#allocation0]]
  $region46: #{tpu_custom_call.1} parent=0
    _
  %s10 = ssub.s32 1, %s8
  %s11 = scalar_select 0, %s10, %s8
  $region1: #{tpu_custom_call.1} parent=0
    #allocation2 [shape = 'u8[4096]{0}', space=vmem, size = 0x1000, scoped, tag = 'input window, operand 1, single buffered']
    #allocation3 [shape = 's32[1]{0}', space=sflag, size = 0x4, scoped, tag = 'scoped memory for tpu_custom_call.1']
    #allocation4 [shape = 's32[1]{0}', space=sflag, size = 0x4, scoped, tag = 'scoped memory for tpu_custom_call.1']
    #allocation5 [shape = 'u8[512]{0}', space=vmem, size = 0x400, scoped, tag = 'input window, operand 4, single buffered']
    #allocation6 [shape = 's32[1]{0}', space=sflag, size = 0x4, scoped, tag = 'scoped memory for tpu_custom_call.1']
    #allocation7 [shape = 'u8[4096]{0}', space=vmem, size = 0x1000, scoped, tag = 'output window, operand 0, single buffered']
    %12 = vsyncpa [#allocation3], 0
    %13 = vsyncpa [#allocation6], 0
    %14 = vsyncpa [#allocation4], 0
    // Predicated region
    $region2: #{tpu_custom_call.1} parent=1 // pred_check
      _
    $region3: #{tpu_custom_call.1} parent=1 // pred_check_branch
      %16 = sbr.rel (0) target = $region5
    $region4: #{tpu_custom_call.1} parent=1 // pred_region
      _
    $region5: #{tpu_custom_call.1} parent=1 // pred_fallthru
      _
    // Predicated region
    $region6: #{tpu_custom_call.1} parent=1 // pred_check
      _
    $region7: #{tpu_custom_call.1} parent=1 // pred_check_branch
      %18 = sbr.rel (0) target = $region9
    $region8: #{tpu_custom_call.1} parent=1 // pred_region
      %s20 = ssub.s32 128, 128
      %21 = vsyncadd [#allocation3], %s20
      %s22 = sshll.u32 [#allocation2], 4
      %s23 = int_to_ptr.vmem [resolvable:$true] %s22
      %28 = dma.hbm_to_vmem [thread:$0]  %s1, 128, %s23, [#allocation3], 64, 64, 4
    $region9: #{tpu_custom_call.1} parent=1 // pred_fallthru
      _
    // Predicated region
    $region10: #{tpu_custom_call.1} parent=1 // pred_check
      _
    $region11: #{tpu_custom_call.1} parent=1 // pred_check_branch
      %30 = sbr.rel (0) target = $region13
    $region12: #{tpu_custom_call.1} parent=1 // pred_region
      _
    $region13: #{tpu_custom_call.1} parent=1 // pred_fallthru
      _
    // Predicated region
    $region14: #{tpu_custom_call.1} parent=1 // pred_check
      _
    $region15: #{tpu_custom_call.1} parent=1 // pred_check_branch
      %32 = sbr.rel (0) target = $region17
    $region16: #{tpu_custom_call.1} parent=1 // pred_region
      _
    $region17: #{tpu_custom_call.1} parent=1 // pred_fallthru
      _
    // Predicated region
    $region18: #{tpu_custom_call.1} parent=1 // pred_check
      _
    $region19: #{tpu_custom_call.1} parent=1 // pred_check_branch
      %34 = sbr.rel (0) target = $region21
    $region20: #{tpu_custom_call.1} parent=1 // pred_region
      %s36 = ssub.s32 16, 16
      %37 = vsyncadd [#allocation6], %s36
      %s39 = sshll.u32 [#allocation5], 4
      %s40 = int_to_ptr.vmem [resolvable:$true] %s39
      %42 = dma.hbm_to_vmem [thread:$0]  %s4, 16, %s40, [#allocation6]
    $region21: #{tpu_custom_call.1} parent=1 // pred_fallthru
      _
    // Predicated region
    $region22: #{tpu_custom_call.1} parent=1 // pred_check
      _
    $region23: #{tpu_custom_call.1} parent=1 // pred_check_branch
      %44 = sbr.rel (0) target = $region25
    $region24: #{tpu_custom_call.1} parent=1 // pred_region
      _
    $region25: #{tpu_custom_call.1} parent=1 // pred_fallthru
      _
    // Predicated region
    $region26: #{tpu_custom_call.1} parent=1 // pred_check
      _
    $region27: #{tpu_custom_call.1} parent=1 // pred_check_branch
      %46 = sbr.rel (0) target = $region29
    $region28: #{tpu_custom_call.1} parent=1 // pred_region
      _
    $region29: #{tpu_custom_call.1} parent=1 // pred_fallthru
      _
    // Predicated region
    $region30: #{tpu_custom_call.1} parent=1 // pred_check
      _
    $region31: #{tpu_custom_call.1} parent=1 // pred_check_branch
      %48 = sbr.rel (0) target = $region33
    $region32: #{tpu_custom_call.1} parent=1 // pred_region
      %49 = dma.done [#allocation3], 128
    $region33: #{tpu_custom_call.1} parent=1 // pred_fallthru
      _
    // Predicated region
    $region34: #{tpu_custom_call.1} parent=1 // pred_check
      _
    $region35: #{tpu_custom_call.1} parent=1 // pred_check_branch
      %51 = sbr.rel (0) target = $region37
    $region36: #{tpu_custom_call.1} parent=1 // pred_region
      %52 = dma.done [#allocation6], 16
    $region37: #{tpu_custom_call.1} parent=1 // pred_fallthru
      _
    %v54 = vld [vmem:[%s0] sm:$0xff]
    %v55 = vld [vmem:[#allocation2] sm:$0xf]
    %v56 = vld [vmem:[#allocation2 + $0x4] sm:$0xf]
    %v57 = vld [vmem:[%s2] sm:$0x1]
    %v58 = vpack.c.bf16 %v54, %v54
    %v60 = vlaneseq
    %v61 = vshrl.u32 %v60, 7
    %v62 = vsub.s32 0, %v61
    %v63 = vrot.slane %v57, %v62
    %v67 = vunpack.c.l.b16 %v55
    %v68 = vunpack.c.l.b16 %v56
    %v69 = vpack.c.b16 %v68, %v67
    %vm71 = vcmask 130048
    %v73 = vsel %vm71, %v58, 0
    %75 = vmatprep.subr.bf16.mxu0 0
    %76 = vmatpush1.bf16.msra.mxu0 0
    %77 = vmatprep.subr.bf16.mxu0 0
    %78 = vmatpush1.bf16.msra.mxu0 0
    %79 = vmatprep.subr.bf16.mxu0 0
    %80 = vmatpush1.bf16.msra.mxu0 0
    %81 = vmatprep.subr.bf16.mxu0 0
    %82 = vmatpush1.bf16.msra.mxu0 0
    %83 = vmatprep.subr.bf16.mxu0 0
    %84 = vmatpush1.bf16.msra.mxu0 0
    %85 = vmatprep.subr.bf16.mxu0 0
    %86 = vmatpush1.bf16.msra.mxu0 0
    %87 = vmatprep.subr.bf16.mxu0 0
    %88 = vmatpush1.bf16.msra.mxu0 0
    %89 = vmatprep.subr.bf16.mxu0 0
    %90 = vmatpush1.bf16.msra.mxu0 %v69
    %91 = vmatprep.subr.bf16.mxu0 0
    %92 = vmatpush2.bf16.msra.mxu0 0
    %93 = vmatprep.subr.bf16.mxu0 0
    %94 = vmatpush2.bf16.msra.mxu0 0
    %95 = vmatprep.subr.bf16.mxu0 0
    %96 = vmatpush2.bf16.msra.mxu0 0
    %97 = vmatprep.subr.bf16.mxu0 0
    %98 = vmatpush2.bf16.msra.mxu0 0
    %99 = vmatprep.subr.bf16.mxu0 0
    %100 = vmatpush2.bf16.msra.mxu0 0
    %101 = vmatprep.subr.bf16.mxu0 0
    %102 = vmatpush2.bf16.msra.mxu0 0
    %103 = vmatprep.subr.bf16.mxu0 0
    %104 = vmatpush2.bf16.msra.mxu0 0
    %105 = vmatprep.subr.bf16.mxu0 0
    %106 = vmatpush2.bf16.msra.mxu0 0
    %107 = vmatprep.mubr.bf16.mxu0 0
    %108 = vmatmul.mubr.bf16.gmra.mxu0 %v73
    %v109 = vpop.f32.mrf.mxu0
    %v110 = vadd.f32 %v63, %v109
    %v111 = vpop.f32.mrf.mxu0
    %v112 = vpop.f32.mrf.mxu0
    %v113 = vpop.f32.mrf.mxu0
    %114 = vdwg.mxu0
    %v115 = vmax.f32 %v110, 0.0
    %v116 = vld [vmem:[%s3] sm:$0xf]
    %v117 = vld [vmem:[%s3 + $0x4] sm:$0xf]
    %v118 = vld [vmem:[%s3 + $0x8] sm:$0xf]
    %v119 = vld [vmem:[%s3 + $0xc] sm:$0xf]
    %v120 = vld [vmem:[%s3 + $0x10] sm:$0xf]
    %v121 = vld [vmem:[%s3 + $0x14] sm:$0xf]
    %v122 = vld [vmem:[%s3 + $0x18] sm:$0xf]
    %v123 = vld [vmem:[%s3 + $0x1c] sm:$0xf]
    %v124 = vld [vmem:[%s3 + $0x20] sm:$0xf]
    %v125 = vld [vmem:[%s3 + $0x24] sm:$0xf]
    %v126 = vld [vmem:[%s3 + $0x28] sm:$0xf]
    %v127 = vld [vmem:[%s3 + $0x2c] sm:$0xf]
    %v128 = vld [vmem:[%s3 + $0x30] sm:$0xf]
    %v129 = vld [vmem:[%s3 + $0x34] sm:$0xf]
    %v130 = vld [vmem:[%s3 + $0x38] sm:$0xf]
    %v131 = vld [vmem:[%s3 + $0x3c] sm:$0xf]
    %v132 = vld [vmem:[#allocation5] sm:$0x1]
    %v133 = vpack.c.bf16 %v115, %v115
    %v135 = vlaneseq
    %v136 = vshrl.u32 %v135, 7
    %v137 = vsub.s32 0, %v136
    %v138 = vrot.slane %v132, %v137
    %v156 = vunpack.c.l.b16 %v116
    %v157 = vunpack.c.l.b16 %v117
    %v158 = vunpack.c.l.b16 %v118
    %v159 = vunpack.c.l.b16 %v119
    %v160 = vunpack.c.l.b16 %v120
    %v161 = vunpack.c.l.b16 %v121
    %v162 = vunpack.c.l.b16 %v122
    %v163 = vunpack.c.l.b16 %v123
    %v164 = vunpack.c.l.b16 %v124
    %v165 = vunpack.c.l.b16 %v125
    %v166 = vunpack.c.l.b16 %v126
    %v167 = vunpack.c.l.b16 %v127
    %v168 = vunpack.c.l.b16 %v128
    %v169 = vunpack.c.l.b16 %v129
    %v170 = vunpack.c.l.b16 %v130
    %v171 = vunpack.c.l.b16 %v131
    %v172 = vpack.c.b16 %v157, %v156
    %v173 = vpack.c.b16 %v159, %v158
    %v174 = vpack.c.b16 %v161, %v160
    %v175 = vpack.c.b16 %v163, %v162
    %v176 = vpack.c.b16 %v165, %v164
    %v177 = vpack.c.b16 %v167, %v166
    %v178 = vpack.c.b16 %v169, %v168
    %v179 = vpack.c.b16 %v171, %v170
    %188 = vmatprep.subr.bf16.mxu0 0
    %189 = vmatpush1.bf16.msra.mxu0 %v179
    %190 = vmatprep.subr.bf16.mxu0 0
    %191 = vmatpush1.bf16.msra.mxu0 %v178
    %192 = vmatprep.subr.bf16.mxu0 0
    %193 = vmatpush1.bf16.msra.mxu0 %v177
    %194 = vmatprep.subr.bf16.mxu0 0
    %195 = vmatpush1.bf16.msra.mxu0 %v176
    %196 = vmatprep.subr.bf16.mxu0 0
    %197 = vmatpush1.bf16.msra.mxu0 %v175
    %198 = vmatprep.subr.bf16.mxu0 0
    %199 = vmatpush1.bf16.msra.mxu0 %v174
    %200 = vmatprep.subr.bf16.mxu0 0
    %201 = vmatpush1.bf16.msra.mxu0 %v173
    %202 = vmatprep.subr.bf16.mxu0 0
    %203 = vmatpush1.bf16.msra.mxu0 %v172
    %204 = vmatprep.subr.bf16.mxu0 0
    %205 = vmatpush2.bf16.msra.mxu0 0
    %206 = vmatprep.subr.bf16.mxu0 0
    %207 = vmatpush2.bf16.msra.mxu0 0
    %208 = vmatprep.subr.bf16.mxu0 0
    %209 = vmatpush2.bf16.msra.mxu0 0
    %210 = vmatprep.subr.bf16.mxu0 0
    %211 = vmatpush2.bf16.msra.mxu0 0
    %212 = vmatprep.subr.bf16.mxu0 0
    %213 = vmatpush2.bf16.msra.mxu0 0
    %214 = vmatprep.subr.bf16.mxu0 0
    %215 = vmatpush2.bf16.msra.mxu0 0
    %216 = vmatprep.subr.bf16.mxu0 0
    %217 = vmatpush2.bf16.msra.mxu0 0
    %218 = vmatprep.subr.bf16.mxu0 0
    %219 = vmatpush2.bf16.msra.mxu0 0
    %220 = vmatprep.mubr.bf16.mxu0 0
    %221 = vmatmul.mubr.bf16.gmra.mxu0 %v133
    %v222 = vpop.f32.mrf.mxu0
    %v223 = vadd.f32 %v138, %v222
    %v224 = vpop.f32.mrf.mxu0
    %v225 = vpop.f32.mrf.mxu0
    %v226 = vpop.f32.mrf.mxu0
    %227 = vdwg.mxu0
    %v228 = vmax.f32 %v223, 0.0
    %v229 = vld [vmem:[%s5] sm:$0xf]
    %v230 = vld [vmem:[%s5 + $0x4] sm:$0xf]
    %v231 = vld [vmem:[%s5 + $0x8] sm:$0xf]
    %v232 = vld [vmem:[%s5 + $0xc] sm:$0xf]
    %v233 = vld [vmem:[%s5 + $0x10] sm:$0xf]
    %v234 = vld [vmem:[%s5 + $0x14] sm:$0xf]
    %v235 = vld [vmem:[%s5 + $0x18] sm:$0xf]
    %v236 = vld [vmem:[%s5 + $0x1c] sm:$0xf]
    %v237 = vld [vmem:[%s5 + $0x20] sm:$0xf]
    %v238 = vld [vmem:[%s5 + $0x24] sm:$0xf]
    %v239 = vld [vmem:[%s5 + $0x28] sm:$0xf]
    %v240 = vld [vmem:[%s5 + $0x2c] sm:$0xf]
    %v241 = vld [vmem:[%s5 + $0x30] sm:$0xf]
    %v242 = vld [vmem:[%s5 + $0x34] sm:$0xf]
    %v243 = vld [vmem:[%s5 + $0x38] sm:$0xf]
    %v244 = vld [vmem:[%s5 + $0x3c] sm:$0xf]
    %v245 = vld [vmem:[%s6] sm:$0x1]
    %v246 = vpack.c.bf16 %v228, %v228
    %v248 = vlaneseq
    %v249 = vshrl.u32 %v248, 7
    %v250 = vsub.s32 0, %v249
    %v251 = vrot.slane %v245, %v250
    %v269 = vunpack.c.l.b16 %v229
    %v270 = vunpack.c.l.b16 %v230
    %v271 = vunpack.c.l.b16 %v231
    %v272 = vunpack.c.l.b16 %v232
    %v273 = vunpack.c.l.b16 %v233
    %v274 = vunpack.c.l.b16 %v234
    %v275 = vunpack.c.l.b16 %v235
    %v276 = vunpack.c.l.b16 %v236
    %v277 = vunpack.c.l.b16 %v237
    %v278 = vunpack.c.l.b16 %v238
    %v279 = vunpack.c.l.b16 %v239
    %v280 = vunpack.c.l.b16 %v240
    %v281 = vunpack.c.l.b16 %v241
    %v282 = vunpack.c.l.b16 %v242
    %v283 = vunpack.c.l.b16 %v243
    %v284 = vunpack.c.l.b16 %v244
    %v285 = vpack.c.b16 %v270, %v269
    %v286 = vpack.c.b16 %v272, %v271
    %v287 = vpack.c.b16 %v274, %v273
    %v288 = vpack.c.b16 %v276, %v275
    %v289 = vpack.c.b16 %v278, %v277
    %v290 = vpack.c.b16 %v280, %v279
    %v291 = vpack.c.b16 %v282, %v281
    %v292 = vpack.c.b16 %v284, %v283
    %301 = vmatprep.subr.bf16.mxu0 0
    %302 = vmatpush1.bf16.msra.mxu0 %v292
    %303 = vmatprep.subr.bf16.mxu0 0
    %304 = vmatpush1.bf16.msra.mxu0 %v291
    %305 = vmatprep.subr.bf16.mxu0 0
    %306 = vmatpush1.bf16.msra.mxu0 %v290
    %307 = vmatprep.subr.bf16.mxu0 0
    %308 = vmatpush1.bf16.msra.mxu0 %v289
    %309 = vmatprep.subr.bf16.mxu0 0
    %310 = vmatpush1.bf16.msra.mxu0 %v288
    %311 = vmatprep.subr.bf16.mxu0 0
    %312 = vmatpush1.bf16.msra.mxu0 %v287
    %313 = vmatprep.subr.bf16.mxu0 0
    %314 = vmatpush1.bf16.msra.mxu0 %v286
    %315 = vmatprep.subr.bf16.mxu0 0
    %316 = vmatpush1.bf16.msra.mxu0 %v285
    %317 = vmatprep.subr.bf16.mxu0 0
    %318 = vmatpush2.bf16.msra.mxu0 0
    %319 = vmatprep.subr.bf16.mxu0 0
    %320 = vmatpush2.bf16.msra.mxu0 0
    %321 = vmatprep.subr.bf16.mxu0 0
    %322 = vmatpush2.bf16.msra.mxu0 0
    %323 = vmatprep.subr.bf16.mxu0 0
    %324 = vmatpush2.bf16.msra.mxu0 0
    %325 = vmatprep.subr.bf16.mxu0 0
    %326 = vmatpush2.bf16.msra.mxu0 0
    %327 = vmatprep.subr.bf16.mxu0 0
    %328 = vmatpush2.bf16.msra.mxu0 0
    %329 = vmatprep.subr.bf16.mxu0 0
    %330 = vmatpush2.bf16.msra.mxu0 0
    %331 = vmatprep.subr.bf16.mxu0 0
    %332 = vmatpush2.bf16.msra.mxu0 0
    %333 = vmatprep.mubr.bf16.mxu0 0
    %334 = vmatmul.mubr.bf16.gmra.mxu0 %v246
    %v335 = vpop.f32.mrf.mxu0
    %v336 = vadd.f32 %v251, %v335
    %v337 = vpop.f32.mrf.mxu0
    %v338 = vpop.f32.mrf.mxu0
    %v339 = vpop.f32.mrf.mxu0
    %340 = vdwg.mxu0
    %vm341 = vcmask 64512
    %342 = vst.msk [vmem:[#allocation7] sm:$0xff] %vm341, %v336
    // Predicated region
    $region38: #{tpu_custom_call.1} parent=1 // pred_check
      _
    $region39: #{tpu_custom_call.1} parent=1 // pred_check_branch
      %344 = sbr.rel (0) target = $region41
    $region40: #{tpu_custom_call.1} parent=1 // pred_region
      %s346 = ssub.s32 128, 128
      %347 = vsyncadd [#allocation4], %s346
      %s349 = sshll.u32 [#allocation7], 4
      %s350 = int_to_ptr.vmem [resolvable:$true] %s349
      %352 = dma.vmem_to_hbm [thread:$0]  %s350, 128, %s7, [#allocation4]
    $region41: #{tpu_custom_call.1} parent=1 // pred_fallthru
      _
    // Predicated region
    $region42: #{tpu_custom_call.1} parent=1 // pred_check
      _
    $region43: #{tpu_custom_call.1} parent=1 // pred_check_branch
      %354 = sbr.rel (0) target = $region45
    $region44: #{tpu_custom_call.1} parent=1 // pred_region
      %355 = dma.done [#allocation4], 128
    $region45: #{tpu_custom_call.1} parent=1 // pred_fallthru
      _
    %356 = vsyncpa [#allocation3], 1
    %357 = vsyncpa [#allocation6], 1
    %358 = vsyncpa [#allocation4], 1

</llo_original>
